<compile_context>
chip_gen: v7x
topology: tpu7x:2x2x1
jax: 0.10.0
libtpu: 0.0.40
codegen_flags: <defaults>
</compile_context>

<pallas_src>
import jax
import jax.numpy as jnp
from jax.experimental import pallas as pl
from jax.experimental.pallas import tpu as pltpu

LANE = 128
SUBLANE = 8


def _round_up(n, m):
    return ((n + m - 1) // m) * m


# ---------------------------------------------------------------------------
# Reacher group representations (2-element reflection group), plain-JAX glue.
# ---------------------------------------------------------------------------
def get_reacher_state_group_representations():
    refl = jnp.diag(
        jnp.array([1.0, 1.0, -1.0, -1.0, 1.0, -1.0, -1.0, -1.0, 1.0, -1.0, 1.0],
                  dtype=jnp.float32)
    )
    return [jnp.eye(11, dtype=jnp.float32), refl]


def get_reacher_action_group_representations():
    return [jnp.eye(2, dtype=jnp.float32), -jnp.eye(2, dtype=jnp.float32)]


# ---------------------------------------------------------------------------
# Deterministic parameter construction (synthetic; shapes per BasisLinear.__init__).
# W ~ xavier-scaled normal, projected onto the equivariant subspace:
#   S(W) = 1/|G| sum_g  P_out(g) @ W @ P_in(g)^{-1}
# bias_init=False  ->  bias = 0  ->  bias dropped from the kernel.
# Weights are returned pre-transposed, zero-padded to lane-dense shapes, and cast to bf16:
#   layer 0: [16, 128]  (real [11, h0*2]),  layer i>0: [128, 128]  (real [h_{i-1}*2, h_i*2]).
# ---------------------------------------------------------------------------
def build_params(key, input_size, hidden_sizes):
    if isinstance(hidden_sizes, int):
        hidden_sizes = [hidden_sizes]
    state_group = get_reacher_state_group_representations()
    action_group = get_reacher_action_group_representations()

    layer_specs = [(input_size, hidden_sizes[0], state_group, action_group)]
    for c_in, c_out in zip(hidden_sizes[:-1], hidden_sizes[1:]):
        layer_specs.append((c_in, c_out, action_group, action_group))

    weights_bf16 = []   # padded, lane-dense, bf16 (kernel inputs)
    weights_f32 = []    # unpadded f32 (reference only)
    prev_padded_width = None

    for li, (c_in, c_out, in_reps, out_reps) in enumerate(layer_specs):
        r_in = in_reps[0].shape[0]
        r_out = out_reps[0].shape[0]
        key, sub = jax.random.split(key)
        gain = (2.0 / (c_in * r_in + c_out * r_out)) ** 0.5  # xavier-style gain
        w = gain * jax.random.normal(sub, (c_out, c_in, r_out, r_in), jnp.float32)

        # equivariant projection over the 2-element group
        acc = jnp.zeros_like(w)
        for p_in, p_out in zip(in_reps, out_reps):
            p_in_inv = jnp.linalg.inv(p_in)
            acc = acc + jnp.einsum("pq,dcqr,rs->dcps", p_out, w, p_in_inv)
        w_eq = acc / float(len(in_reps))

        # flatten: y[b,(d,o)] = sum_{(c,a)} x[b,(c,a)] * W[d,c,o,a]
        w_mat = jnp.transpose(w_eq, (0, 2, 1, 3)).reshape(c_out * r_out, c_in * r_in)
        w_t = w_mat.T  # [C_in*R_in, C_out*R_out]
        weights_f32.append(w_t)

        k_real, n_real = w_t.shape
        if li == 0:
            k_pad = _round_up(k_real, 2 * SUBLANE)   # 11 -> 16
        else:
            k_pad = prev_padded_width                # matches padded previous output width
        n_pad = _round_up(n_real, LANE)              # 64 -> 128

        w_pad = jnp.zeros((k_pad, n_pad), jnp.float32).at[:k_real, :n_real].set(w_t)
        weights_bf16.append(w_pad.astype(jnp.bfloat16))
        prev_padded_width = n_pad

    meta = {
        "k0_real": layer_specs[0][0] * state_group[0].shape[0],       # 11
        "k0_padded": weights_bf16[0].shape[0],                        # 16
        "out_real": hidden_sizes[-1] * action_group[0].shape[0],      # h_last * 2
        "c_out_last": hidden_sizes[-1],
        "r_out_last": action_group[0].shape[0],
    }
    return weights_bf16, weights_f32, meta


# ---------------------------------------------------------------------------
# Pallas kernel: fused (bf16 matmul -> f32 accumulate -> ReLU) chain over all layers.
# No bias (bias_init=False). Zero-padded feature columns stay zero through ReLU,
# and zero-padded weight rows make the padding exact.
# ---------------------------------------------------------------------------
def _mlp_kernel(x_ref, *refs):
    out_ref = refs[-1]
    w_refs = refs[:-1]
    h = x_ref[...]                                  # bf16 [TB, K0_pad]
    for w_ref in w_refs:
        h = jnp.dot(h.astype(jnp.bfloat16), w_ref[...],
                    preferred_element_type=jnp.float32)
        h = jnp.maximum(h, 0.0)                     # ReLU in f32
    out_ref[...] = h                                # f32 [TB, 128] lane-dense store


def basis_reacher_forward(state, weights, meta, *, tb_max=512):
    """Forward pass of BasisReacherNetworkWrapper (Pallas TPU)."""
    if state.ndim < 2:
        state = state.reshape(-1, state.shape[0])
    batch = state.shape[0]
    # unsqueeze(1) -> [B, 1, R_in]; flatten (channels=1, repr) -> [B, R_in]
    x = state.reshape(batch, -1).astype(jnp.float32)

    k0_pad = meta["k0_padded"]
    n_pad = weights[-1].shape[1]

    # batch tiling: TB rows per grid step, batch zero-padded to a multiple of TB
    tb = min(tb_max, _round_up(batch, SUBLANE))
    b_pad = _round_up(batch, tb)

    x_pad = jnp.zeros((b_pad, k0_pad), jnp.bfloat16)
    x_pad = x_pad.at[:batch, :x.shape[1]].set(x.astype(jnp.bfloat16))

    in_specs = [pl.BlockSpec((tb, k0_pad), lambda i: (i, 0))]
    for w in weights:
        # constant index_map -> weights stay VMEM-resident across batch tiles
        in_specs.append(pl.BlockSpec(w.shape, lambda i: (0, 0)))
    out_spec = pl.BlockSpec((tb, n_pad), lambda i: (i, 0))

    flops = 2 * b_pad * sum(w.shape[0] * w.shape[1] for w in weights)
    bytes_accessed = (x_pad.size * 2 + b_pad * n_pad * 4
                      + sum(w.size * 2 for w in weights))

    y = pl.pallas_call(
        _mlp_kernel,
        out_shape=jax.ShapeDtypeStruct((b_pad, n_pad), jnp.float32),
        grid_spec=pl.GridSpec(
            grid=(b_pad // tb,),
            in_specs=in_specs,
            out_specs=out_spec,
        ),
        compiler_params=pltpu.CompilerParams(
            dimension_semantics=("parallel",)),   # shards batch tiles across TCs on v7x
        cost_estimate=pl.CostEstimate(
            flops=flops, transcendentals=0, bytes_accessed=bytes_accessed),
    )(x_pad, *weights)

    n_real = meta["out_real"]
    # [B, h_last * R_out] -> [B, h_last, R_out]  (matches PyTorch output)
    return y[:batch, :n_real].reshape(batch, meta["c_out_last"], meta["r_out_last"])


# ---------------------------------------------------------------------------
def _reference_bf16(state, weights_bf16, meta):
    """Plain-JAX reference of the same bf16 padded chain."""
    batch = state.shape[0]
    x = state.reshape(batch, -1).astype(jnp.float32)
    k0_pad = meta["k0_padded"]
    h = jnp.zeros((batch, k0_pad), jnp.float32).at[:, :x.shape[1]].set(x)
    h = h.astype(jnp.bfloat16)
    for w in weights_bf16:
        h = jnp.maximum(
            jnp.dot(h.astype(jnp.bfloat16), w, preferred_element_type=jnp.float32), 0.0)
    n_real = meta["out_real"]
    return h[:, :n_real].reshape(batch, meta["c_out_last"], meta["r_out_last"])


def _reference_f32(state, weights_f32, meta):
    """Plain-JAX f32 reference of the unpadded chain (zero bias)."""
    batch = state.shape[0]
    h = state.reshape(batch, -1).astype(jnp.float32)
    for w in weights_f32:
        h = jnp.maximum(h @ w, 0.0)
    return h.reshape(batch, meta["c_out_last"], meta["r_out_last"])


# ---------------------------------------------------------------------------
if __name__ == "__main__":
    key = jax.random.PRNGKey(0)
    key_params, key_state, key_state2 = jax.random.split(key, 3)

    input_size = 1            # channels_in of the input BasisLinear (state is unsqueezed)
    hidden_sizes = [32, 32]   # two BasisLinear layers
    batch = 2
    state_dim = 11            # reacher observation / repr_size_in of the state group

    weights_bf16, weights_f32, meta = build_params(key_params, input_size, hidden_sizes)
    state = jax.random.normal(key_state, (batch, state_dim), dtype=jnp.float32)

    out = basis_reacher_forward(state, weights_bf16, meta)
    out = jax.block_until_ready(out)
    assert out.shape == (batch, hidden_sizes[-1], 2), out.shape

    # exact-path check (same bf16 ops) and semantic check vs unpadded f32 chain
    ref_bf16 = _reference_bf16(state, weights_bf16, meta)
    assert jnp.allclose(out, ref_bf16, atol=1e-4, rtol=1e-4)
    ref_f32 = _reference_f32(state, weights_f32, meta)
    assert jnp.allclose(out, ref_f32, atol=5e-2, rtol=5e-2)

    # larger, non-multiple-of-TB batch to exercise the batch-tiled grid + padding path
    big_batch = 600
    state_big = jax.random.normal(key_state2, (big_batch, state_dim), dtype=jnp.float32)
    out_big = jax.block_until_ready(basis_reacher_forward(state_big, weights_bf16, meta))
    assert out_big.shape == (big_batch, hidden_sizes[-1], 2), out_big.shape
    assert jnp.allclose(out_big, _reference_bf16(state_big, weights_bf16, meta),
                        atol=1e-4, rtol=1e-4)

    print("KERNEL_OK")
</pallas_src>

<mosaic_0001>
module attributes {stable_mosaic.version = 11 : i64} {
  func.func @_mlp_kernel(%arg0: i32, %arg1: memref<8x16xbf16, #tpu.memory_space<vmem>>, %arg2: memref<16x128xbf16, #tpu.memory_space<vmem>>, %arg3: memref<128x128xbf16, #tpu.memory_space<vmem>>, %arg4: memref<8x128xf32, #tpu.memory_space<vmem>>) attributes {dimension_semantics = [#tpu.dimension_semantics<parallel>], iteration_bounds = array<i64: 1>, scalar_prefetch = 0 : i64, scratch_operands = 0 : i64, tpu.core_type = #tpu.core_type<tc>, window_params = [{transform_indices = @transform_0, window_bounds = array<i64: 8, 16>}, {pipeline_mode = #tpu.pipeline_mode<synchronous>, transform_indices = @transform_1, window_bounds = array<i64: 16, 128>}, {pipeline_mode = #tpu.pipeline_mode<synchronous>, transform_indices = @transform_2, window_bounds = array<i64: 128, 128>}, {transform_indices = @transform_3, window_bounds = array<i64: 8, 128>}]} {
    %c0 = arith.constant 0 : index
    %c0_0 = arith.constant 0 : index
    %0 = vector.load %arg1[%c0, %c0_0] : memref<8x16xbf16, #tpu.memory_space<vmem>>, vector<8x16xbf16>
    %c0_1 = arith.constant 0 : index
    %c0_2 = arith.constant 0 : index
    %1 = vector.load %arg2[%c0_1, %c0_2] : memref<16x128xbf16, #tpu.memory_space<vmem>>, vector<16x128xbf16>
    %cst = arith.constant dense<0.000000e+00> : vector<8x128xf32>
    %2 = tpu.matmul %0, %1, %cst {dimension_numbers = #tpu.dot_dimension_numbers<[1], [0], [0], [1], [0, 0, 1, 1], [], []>} : vector<8x16xbf16>, vector<16x128xbf16>, vector<8x128xf32> -> vector<8x128xf32>
    %cst_3 = arith.constant 0.000000e+00 : f32
    %3 = vector.broadcast %cst_3 : f32 to vector<8x128xf32>
    %4 = arith.maximumf %2, %3 : vector<8x128xf32>
    %5 = arith.truncf %4 : vector<8x128xf32> to vector<8x128xbf16>
    %c0_4 = arith.constant 0 : index
    %c0_5 = arith.constant 0 : index
    %6 = vector.load %arg3[%c0_4, %c0_5] : memref<128x128xbf16, #tpu.memory_space<vmem>>, vector<128x128xbf16>
    %cst_6 = arith.constant dense<0.000000e+00> : vector<8x128xf32>
    %7 = tpu.matmul %5, %6, %cst_6 {dimension_numbers = #tpu.dot_dimension_numbers<[1], [0], [0], [1], [0, 0, 1, 1], [], []>} : vector<8x128xbf16>, vector<128x128xbf16>, vector<8x128xf32> -> vector<8x128xf32>
    %cst_7 = arith.constant 0.000000e+00 : f32
    %8 = vector.broadcast %cst_7 : f32 to vector<8x128xf32>
    %9 = arith.maximumf %7, %8 : vector<8x128xf32>
    %c0_8 = arith.constant 0 : index
    %c0_9 = arith.constant 0 : index
    %10 = vector.load %arg4[%c0_8, %c0_9] : memref<8x128xf32, #tpu.memory_space<vmem>>, vector<8x128xf32>
    tpu.vector_store %arg4[%c0_8, %c0_9], %9 {strides = array<i32>} : memref<8x128xf32, #tpu.memory_space<vmem>>, vector<8x128xf32>,
    return
  }
  func.func @transform_0(%arg0: i32) -> (i32, i32) {
    %c0_i32 = arith.constant 0 : i32
    %c0_i32_0 = arith.constant 0 : i32
    return %arg0, %c0_i32 : i32, i32
  }
  func.func @transform_1(%arg0: i32) -> (i32, i32) {
    %c0_i32 = arith.constant 0 : i32
    %c0_i32_0 = arith.constant 0 : i32
    %c0_i32_1 = arith.constant 0 : i32
    return %c0_i32, %c0_i32_0 : i32, i32
  }
  func.func @transform_2(%arg0: i32) -> (i32, i32) {
    %c0_i32 = arith.constant 0 : i32
    %c0_i32_0 = arith.constant 0 : i32
    %c0_i32_1 = arith.constant 0 : i32
    return %c0_i32, %c0_i32_0 : i32, i32
  }
  func.func @transform_3(%arg0: i32) -> (i32, i32) {
    %c0_i32 = arith.constant 0 : i32
    %c0_i32_0 = arith.constant 0 : i32
    return %arg0, %c0_i32 : i32, i32
  }
}

</mosaic_0001>

<llo_original>
// kernel: tpu_custom_call.1
$region0: #{tpu_custom_call.1}
  #allocation0 [shape = 'u32[]', space=smem, size = 0x4, offset = 0x4, fixed_abs, tag = 'smem constant byte address 0x4 - core index']
  #allocation1 [shape = 'u32[144,128]{1,0:T(1,128)}', space=vmem, size = 0x12000, scoped, tag = 'internal scratch']
  %s0 = inlined_call_operand.hbm [shape: bf16[8,16], index: 0, kind: input, shape index: {}]
  %s1 = inlined_call_operand.hbm [shape: bf16[16,128], index: 1, kind: input, shape index: {}]
  %s2 = inlined_call_operand.hbm [shape: bf16[128,128], index: 2, kind: input, shape index: {}]
  %s3 = inlined_call_operand.hbm [shape: f32[8,128], index: 3, kind: output, shape index: {}]
  %s4 = sld [smem:[#allocation0]]
  $region34: #{tpu_custom_call.1} parent=0
    _
  %s6 = ssub.s32 1, %s4
  %s7 = scalar_select 0, %s6, %s4
  $region1: #{tpu_custom_call.1} parent=0
    #allocation2 [shape = 'u8[2048]{0}', space=vmem, size = 0x800, scoped, tag = 'input window, operand 0, single buffered']
    #allocation3 [shape = 's32[1]{0}', space=sflag, size = 0x4, scoped, tag = 'scoped memory for tpu_custom_call.1']
    #allocation4 [shape = 's32[1]{0}', space=sflag, size = 0x4, scoped, tag = 'scoped memory for tpu_custom_call.1']
    #allocation5 [shape = 'u8[4096]{0}', space=vmem, size = 0x1000, scoped, tag = 'input window, operand 1, single buffered']
    #allocation6 [shape = 's32[1]{0}', space=sflag, size = 0x4, scoped, tag = 'scoped memory for tpu_custom_call.1']
    #allocation7 [shape = 'u8[32768]{0}', space=vmem, size = 0x8000, scoped, tag = 'input window, operand 2, single buffered']
    #allocation8 [shape = 'u8[4096]{0}', space=vmem, size = 0x1000, scoped, tag = 'output window, operand 0, single buffered']
    %8 = vsyncpa [#allocation3], 0
    %9 = vsyncpa [#allocation6], 0
    %10 = vsyncpa [#allocation4], 0
    // Predicated region
    $region2: #{tpu_custom_call.1} parent=1 // pred_check
      _
    $region3: #{tpu_custom_call.1} parent=1 // pred_check_branch
      %12 = sbr.rel (0) target = $region5
    $region4: #{tpu_custom_call.1} parent=1 // pred_region
      %s14 = ssub.s32 64, 64
      %15 = vsyncadd [#allocation3], %s14
      %s17 = sshll.u32 [#allocation2], 4
      %s18 = int_to_ptr.vmem [resolvable:$true] %s17
      %20 = dma.hbm_to_vmem [thread:$0]  %s0, 64, %s18, [#allocation3]
    $region5: #{tpu_custom_call.1} parent=1 // pred_fallthru
      _
    // Predicated region
    $region6: #{tpu_custom_call.1} parent=1 // pred_check
      _
    $region7: #{tpu_custom_call.1} parent=1 // pred_check_branch
      %22 = sbr.rel (0) target = $region9
    $region8: #{tpu_custom_call.1} parent=1 // pred_region
      %s24 = ssub.s32 128, 128
      %25 = vsyncadd [#allocation6], %s24
      %s26 = sshll.u32 [#allocation5], 4
      %s27 = int_to_ptr.vmem [resolvable:$true] %s26
      %32 = dma.hbm_to_vmem [thread:$0]  %s1, 128, %s27, [#allocation6], 64, 64, 4
    $region9: #{tpu_custom_call.1} parent=1 // pred_fallthru
      _
    // Predicated region
    $region10: #{tpu_custom_call.1} parent=1 // pred_check
      _
    $region11: #{tpu_custom_call.1} parent=1 // pred_check_branch
      %34 = sbr.rel (0) target = $region13
    $region12: #{tpu_custom_call.1} parent=1 // pred_region
      %s36 = ssub.s32 1024, 1024
      %37 = vsyncadd [#allocation6], %s36
      %s38 = sshll.u32 [#allocation7], 4
      %s39 = int_to_ptr.vmem [resolvable:$true] %s38
      %44 = dma.hbm_to_vmem [thread:$0]  %s2, 1024, %s39, [#allocation6], 64, 64, 4
    $region13: #{tpu_custom_call.1} parent=1 // pred_fallthru
      _
    // Predicated region
    $region14: #{tpu_custom_call.1} parent=1 // pred_check
      _
    $region15: #{tpu_custom_call.1} parent=1 // pred_check_branch
      %46 = sbr.rel (0) target = $region17
    $region16: #{tpu_custom_call.1} parent=1 // pred_region
      %47 = dma.done [#allocation3], 64
    $region17: #{tpu_custom_call.1} parent=1 // pred_fallthru
      _
    // Predicated region
    $region18: #{tpu_custom_call.1} parent=1 // pred_check
      _
    $region19: #{tpu_custom_call.1} parent=1 // pred_check_branch
      %49 = sbr.rel (0) target = $region21
    $region20: #{tpu_custom_call.1} parent=1 // pred_region
      %50 = dma.done [#allocation6], 128
    $region21: #{tpu_custom_call.1} parent=1 // pred_fallthru
      _
    // Predicated region
    $region22: #{tpu_custom_call.1} parent=1 // pred_check
      _
    $region23: #{tpu_custom_call.1} parent=1 // pred_check_branch
      %52 = sbr.rel (0) target = $region25
    $region24: #{tpu_custom_call.1} parent=1 // pred_region
      %53 = dma.done [#allocation6], 1024
    $region25: #{tpu_custom_call.1} parent=1 // pred_fallthru
      _
    %v55 = vld [vmem:[#allocation2] sm:$0xf]
    %v56 = vld [vmem:[#allocation5] sm:$0xf]
    %v57 = vld [vmem:[#allocation5 + $0x4] sm:$0xf]
    %v60 = vunpack.c.l.b16 %v56
    %v61 = vunpack.c.l.b16 %v57
    %v62 = vpack.c.b16 %v61, %v60
    %vm64 = vcmask 130048
    %v66 = vsel %vm64, %v55, 0
    %68 = vmatprep.subr.bf16.mxu0 0
    %69 = vmatpush1.bf16.msra.mxu0 %v62
    %70 = vmatprep.subr.bf16.mxu0 0
    %71 = vmatpush1.bf16.msra.mxu0 0
    %72 = vmatprep.subr.bf16.mxu0 0
    %73 = vmatpush1.bf16.msra.mxu0 0
    %74 = vmatprep.subr.bf16.mxu0 0
    %75 = vmatpush1.bf16.msra.mxu0 0
    %76 = vmatprep.subr.bf16.mxu0 0
    %77 = vmatpush1.bf16.msra.mxu0 0
    %78 = vmatprep.subr.bf16.mxu0 0
    %79 = vmatpush1.bf16.msra.mxu0 0
    %80 = vmatprep.subr.bf16.mxu0 0
    %81 = vmatpush1.bf16.msra.mxu0 0
    %82 = vmatprep.subr.bf16.mxu0 0
    %83 = vmatpush1.bf16.msra.mxu0 0
    %84 = vmatprep.subr.bf16.mxu0 0
    %85 = vmatpush1.bf16.msra.mxu0 0
    %86 = vmatprep.subr.bf16.mxu0 0
    %87 = vmatpush1.bf16.msra.mxu0 0
    %88 = vmatprep.subr.bf16.mxu0 0
    %89 = vmatpush1.bf16.msra.mxu0 0
    %90 = vmatprep.subr.bf16.mxu0 0
    %91 = vmatpush1.bf16.msra.mxu0 0
    %92 = vmatprep.subr.bf16.mxu0 0
    %93 = vmatpush1.bf16.msra.mxu0 0
    %94 = vmatprep.subr.bf16.mxu0 0
    %95 = vmatpush1.bf16.msra.mxu0 0
    %96 = vmatprep.subr.bf16.mxu0 0
    %97 = vmatpush1.bf16.msra.mxu0 0
    %98 = vmatprep.subr.bf16.mxu0 0
    %99 = vmatpush1.bf16.msra.mxu0 0
    %100 = vmatprep.mubr.bf16.mxu0 0
    %101 = vmatmul.mubr.bf16.gmra.mrb[0].mxu0 %v66
    %v102 = vpop.f32.mrb[0].mxu0
    %v103 = vadd.f32 0.0, %v102
    %v104 = vpop.f32.mrb[0].mxu0
    %v105 = vpop.f32.mrb[0].mxu0
    %v106 = vpop.f32.mrb[0].mxu0
    %107 = vdwg.mxu0
    %v108 = vmax.f32 %v103, 0.0
    %v109 = vpack.c.bf16 %v108, %v108
    %v110 = vld [vmem:[#allocation7] sm:$0xf]
    %v111 = vld [vmem:[#allocation7 + $0x4] sm:$0xf]
    %v112 = vld [vmem:[#allocation7 + $0x8] sm:$0xf]
    %v113 = vld [vmem:[#allocation7 + $0xc] sm:$0xf]
    %v114 = vld [vmem:[#allocation7 + $0x10] sm:$0xf]
    %v115 = vld [vmem:[#allocation7 + $0x14] sm:$0xf]
    %v116 = vld [vmem:[#allocation7 + $0x18] sm:$0xf]
    %v117 = vld [vmem:[#allocation7 + $0x1c] sm:$0xf]
    %v118 = vld [vmem:[#allocation7 + $0x20] sm:$0xf]
    %v119 = vld [vmem:[#allocation7 + $0x24] sm:$0xf]
    %v120 = vld [vmem:[#allocation7 + $0x28] sm:$0xf]
    %v121 = vld [vmem:[#allocation7 + $0x2c] sm:$0xf]
    %v122 = vld [vmem:[#allocation7 + $0x30] sm:$0xf]
    %v123 = vld [vmem:[#allocation7 + $0x34] sm:$0xf]
    %v124 = vld [vmem:[#allocation7 + $0x38] sm:$0xf]
    %v125 = vld [vmem:[#allocation7 + $0x3c] sm:$0xf]
    %v142 = vunpack.c.l.b16 %v110
    %v143 = vunpack.c.l.b16 %v111
    %v144 = vunpack.c.l.b16 %v112
    %v145 = vunpack.c.l.b16 %v113
    %v146 = vunpack.c.l.b16 %v114
    %v147 = vunpack.c.l.b16 %v115
    %v148 = vunpack.c.l.b16 %v116
    %v149 = vunpack.c.l.b16 %v117
    %v150 = vunpack.c.l.b16 %v118
    %v151 = vunpack.c.l.b16 %v119
    %v152 = vunpack.c.l.b16 %v120
    %v153 = vunpack.c.l.b16 %v121
    %v154 = vunpack.c.l.b16 %v122
    %v155 = vunpack.c.l.b16 %v123
    %v156 = vunpack.c.l.b16 %v124
    %v157 = vunpack.c.l.b16 %v125
    %v158 = vpack.c.b16 %v143, %v142
    %v159 = vpack.c.b16 %v145, %v144
    %v160 = vpack.c.b16 %v147, %v146
    %v161 = vpack.c.b16 %v149, %v148
    %v162 = vpack.c.b16 %v151, %v150
    %v163 = vpack.c.b16 %v153, %v152
    %v164 = vpack.c.b16 %v155, %v154
    %v165 = vpack.c.b16 %v157, %v156
    %174 = vmatprep.subr.bf16.mxu0 0
    %175 = vmatpush1.bf16.msra.mxu0 %v158
    %176 = vmatprep.subr.bf16.mxu0 0
    %177 = vmatpush1.bf16.msra.mxu0 %v159
    %178 = vmatprep.subr.bf16.mxu0 0
    %179 = vmatpush1.bf16.msra.mxu0 %v160
    %180 = vmatprep.subr.bf16.mxu0 0
    %181 = vmatpush1.bf16.msra.mxu0 %v161
    %182 = vmatprep.subr.bf16.mxu0 0
    %183 = vmatpush1.bf16.msra.mxu0 %v162
    %184 = vmatprep.subr.bf16.mxu0 0
    %185 = vmatpush1.bf16.msra.mxu0 %v163
    %186 = vmatprep.subr.bf16.mxu0 0
    %187 = vmatpush1.bf16.msra.mxu0 %v164
    %188 = vmatprep.subr.bf16.mxu0 0
    %189 = vmatpush1.bf16.msra.mxu0 %v165
    %190 = vmatprep.subr.bf16.mxu0 0
    %191 = vmatpush1.bf16.msra.mxu0 0
    %192 = vmatprep.subr.bf16.mxu0 0
    %193 = vmatpush1.bf16.msra.mxu0 0
    %194 = vmatprep.subr.bf16.mxu0 0
    %195 = vmatpush1.bf16.msra.mxu0 0
    %196 = vmatprep.subr.bf16.mxu0 0
    %197 = vmatpush1.bf16.msra.mxu0 0
    %198 = vmatprep.subr.bf16.mxu0 0
    %199 = vmatpush1.bf16.msra.mxu0 0
    %200 = vmatprep.subr.bf16.mxu0 0
    %201 = vmatpush1.bf16.msra.mxu0 0
    %202 = vmatprep.subr.bf16.mxu0 0
    %203 = vmatpush1.bf16.msra.mxu0 0
    %204 = vmatprep.subr.bf16.mxu0 0
    %205 = vmatpush1.bf16.msra.mxu0 0
    %206 = vmatprep.mubr.bf16.mxu0 0
    %207 = vmatmul.mubr.bf16.gmra.mrb[0].mxu0 %v109
    %v208 = vpop.f32.mrb[0].mxu0
    %v209 = vadd.f32 0.0, %v208
    %v210 = vpop.f32.mrb[0].mxu0
    %v211 = vpop.f32.mrb[0].mxu0
    %v212 = vpop.f32.mrb[0].mxu0
    %213 = vdwg.mxu0
    %v214 = vmax.f32 %v209, 0.0
    %215 = vst [vmem:[#allocation8] sm:$0xff] %v214
    // Predicated region
    $region26: #{tpu_custom_call.1} parent=1 // pred_check
      _
    $region27: #{tpu_custom_call.1} parent=1 // pred_check_branch
      %217 = sbr.rel (0) target = $region29
    $region28: #{tpu_custom_call.1} parent=1 // pred_region
      %s219 = ssub.s32 128, 128
      %220 = vsyncadd [#allocation4], %s219
      %s222 = sshll.u32 [#allocation8], 4
      %s223 = int_to_ptr.vmem [resolvable:$true] %s222
      %225 = dma.vmem_to_hbm [thread:$0]  %s223, 128, %s3, [#allocation4]
    $region29: #{tpu_custom_call.1} parent=1 // pred_fallthru
      _
    // Predicated region
    $region30: #{tpu_custom_call.1} parent=1 // pred_check
      _
    $region31: #{tpu_custom_call.1} parent=1 // pred_check_branch
      %227 = sbr.rel (0) target = $region33
    $region32: #{tpu_custom_call.1} parent=1 // pred_region
      %228 = dma.done [#allocation4], 128
    $region33: #{tpu_custom_call.1} parent=1 // pred_fallthru
      _
    %229 = vsyncpa [#allocation3], 1
    %230 = vsyncpa [#allocation6], 1
    %231 = vsyncpa [#allocation4], 1

</llo_original>
